<compile_context>
chip_gen: v7x
topology: tpu7x:2x2x1
jax: 0.10.0
libtpu: 0.0.40
codegen_flags: <defaults>
</compile_context>

<pallas_src>
from typing import NamedTuple

import jax
import jax.numpy as jnp
from jax.experimental import pallas as pl
from jax.experimental.pallas import tpu as pltpu


def _round_up(n: int, m: int) -> int:
    return ((n + m - 1) // m) * m


def _sublane_multiple(dtype) -> int:
    # f32 -> 8, bf16 -> 16, int8/fp8 -> 32 sublanes per minimum tile.
    return {4: 8, 2: 16, 1: 32}.get(jnp.dtype(dtype).itemsize, 8)


def _vmem_budget_bytes() -> int:
    try:
        cap = int(pltpu.get_tpu_info().vmem_capacity_bytes)
    except Exception:
        cap = 64 * 1024 * 1024  # conservative fallback (v7x physical VMEM)
    return int(0.8 * cap)


# --------------------------------------------------------------------------
# Kernels
# --------------------------------------------------------------------------
def _mlp_kernel_fused(x_ref, w1_ref, b1_ref, w2_ref, b2_ref, out_ref):
    """out = relu(x @ W1 + b1) @ W2 + b2 with weights fully resident in VMEM."""
    x = x_ref[...].astype(w1_ref.dtype)                 # bf16 MXU operand
    h = jnp.dot(x, w1_ref[...], preferred_element_type=jnp.float32)
    h = jnp.maximum(h + b1_ref[...], 0.0)               # f32 epilogue
    y = jnp.dot(h.astype(w2_ref.dtype), w2_ref[...],
                preferred_element_type=jnp.float32)
    out_ref[...] = (y + b2_ref[...]).astype(out_ref.dtype)


def _mlp_kernel_htile(x_ref, w1_ref, b1_ref, w2_ref, b2_ref, out_ref, acc_ref):
    """Hidden-dim tiled variant: fc1 N-tile / fc2 K-tile + f32 accumulator."""
    k = pl.program_id(1)

    @pl.when(k == 0)
    def _():
        acc_ref[...] = jnp.zeros_like(acc_ref)

    x = x_ref[...].astype(w1_ref.dtype)
    h = jnp.dot(x, w1_ref[...], preferred_element_type=jnp.float32)
    h = jnp.maximum(h + b1_ref[...], 0.0)
    acc_ref[...] += jnp.dot(h.astype(w2_ref.dtype), w2_ref[...],
                            preferred_element_type=jnp.float32)

    @pl.when(k == pl.num_programs(1) - 1)
    def _():
        out_ref[...] = (acc_ref[...] + b2_ref[...]).astype(out_ref.dtype)


# --------------------------------------------------------------------------
# One-time parameter preparation (hoisted out of the forward path)
# --------------------------------------------------------------------------
class MLPParams(NamedTuple):
    w1: jax.Array    # [D_in, H_p]      bf16, K-major, hidden zero-padded
    b1: jax.Array    # [1, H_p]         f32
    w2: jax.Array    # [H_p, D_out_p]   bf16, K-major, zero-padded
    b2: jax.Array    # [1, D_out_p]     f32
    d_in: int
    hidden: int
    h_p: int
    d_out: int
    d_out_p: int


def prepare_params(w1, b1, w2, b2, compute_dtype=jnp.bfloat16) -> MLPParams:
    """Transpose to K-major, pad H and D_out to lane-dense multiples of 128,
    cast matmul operands to bf16 (MXU peak dtype). Biases stay f32."""
    hidden, d_in = w1.shape
    d_out = w2.shape[0]
    h_p = _round_up(hidden, 128)
    d_out_p = _round_up(max(d_out, 1), 128)

    w1_t = jnp.zeros((d_in, h_p), compute_dtype).at[:, :hidden].set(
        jnp.asarray(w1, compute_dtype).T)
    b1_p = jnp.zeros((1, h_p), jnp.float32).at[0, :hidden].set(
        jnp.asarray(b1, jnp.float32))
    w2_t = jnp.zeros((h_p, d_out_p), compute_dtype).at[:hidden, :d_out].set(
        jnp.asarray(w2, compute_dtype).T)
    b2_p = jnp.zeros((1, d_out_p), jnp.float32).at[0, :d_out].set(
        jnp.asarray(b2, jnp.float32))
    return MLPParams(w1_t, b1_p, w2_t, b2_p, d_in, hidden, h_p, d_out, d_out_p)


# --------------------------------------------------------------------------
# Forward
# --------------------------------------------------------------------------
def mlp_forward(x, params: MLPParams, *, block_b: int = 256,
                single_buffer_weights: bool = True):
    """relu(x @ W1^T + b1) @ W2^T + b2 for x: [B, D_in] -> [B, D_out]."""
    batch, d_in = x.shape
    assert d_in == params.d_in, (d_in, params.d_in)

    h_p, d_out_p = params.h_p, params.d_out_p
    out_dtype = x.dtype
    x_bytes = jnp.dtype(x.dtype).itemsize
    o_bytes = jnp.dtype(out_dtype).itemsize
    w_bytes = jnp.dtype(params.w1.dtype).itemsize

    budget = _vmem_budget_bytes()
    sub = _sublane_multiple(x.dtype)

    # Batch tile: fill the MXU M dim (256 on v6e/v7x; v5e users may pass 128),
    # rounded to the dtype sublane multiple and clamped to the batch size.
    tb = max(sub, min(_round_up(block_b, sub), _round_up(batch, sub)))

    def tile_act_bytes(tb_, h_tile):
        # double-buffered x/out tiles + f32 intermediates (h, y, accumulator)
        return (2 * tb_ * d_in * x_bytes
                + 2 * tb_ * d_out_p * o_bytes
                + 4 * tb_ * (h_tile + 2 * d_out_p))

    weight_copies = 1 if single_buffer_weights else 2
    resident_bytes = weight_copies * (
        (params.w1.size + params.w2.size) * w_bytes
        + 4 * (params.b1.size + params.b2.size))

    # Shrink tb if resident weights + per-tile activations overflow the budget.
    while tb > sub and resident_bytes + tile_act_bytes(tb, h_p) > budget:
        tb = max(sub, _round_up(tb // 2, sub))
    n_b = pl.cdiv(batch, tb)

    use_resident = resident_bytes + tile_act_bytes(tb, h_p) <= budget

    flops = 2 * batch * (d_in * h_p + h_p * d_out_p)
    bytes_accessed = (batch * d_in * x_bytes
                      + (params.w1.size + params.w2.size) * w_bytes
                      + 4 * (params.b1.size + params.b2.size)
                      + batch * d_out_p * o_bytes)
    cost = pl.CostEstimate(flops=int(flops), transcendentals=0,
                           bytes_accessed=int(bytes_accessed))

    def const_spec(shape, n_grid_args):
        imap = (lambda i: (0, 0)) if n_grid_args == 1 else (lambda i, k: (0, 0))
        if single_buffer_weights:
            # Block index never changes -> a second buffer is pure VMEM waste.
            return pl.BlockSpec(shape, imap, pipeline_mode=pl.Buffered(1))
        return pl.BlockSpec(shape, imap)

    if use_resident:
        grid_spec = pltpu.PrefetchScalarGridSpec(
            num_scalar_prefetch=0,
            grid=(n_b,),
            in_specs=[
                pl.BlockSpec((tb, d_in), lambda i: (i, 0)),   # x tile
                const_spec((d_in, h_p), 1),                   # W1 resident
                const_spec((1, h_p), 1),                      # b1 resident
                const_spec((h_p, d_out_p), 1),                # W2 resident
                const_spec((1, d_out_p), 1),                  # b2 resident
            ],
            out_specs=pl.BlockSpec((tb, d_out_p), lambda i: (i, 0)),
        )
        out_p = pl.pallas_call(
            _mlp_kernel_fused,
            out_shape=jax.ShapeDtypeStruct((batch, d_out_p), out_dtype),
            grid_spec=grid_spec,
            compiler_params=pltpu.CompilerParams(
                dimension_semantics=("parallel",),
                vmem_limit_bytes=int(budget)),
            cost_estimate=cost,
        )(x, params.w1, params.b1, params.w2, params.b2)
    else:
        # Weights do not fit in VMEM (binds first on v7x's 64 MiB): stream
        # hidden-dim tiles over a trailing "arbitrary" reduction axis.
        th = 128
        for cand in (4096, 2048, 1024, 512, 256, 128):
            if h_p % cand != 0:
                continue
            step = (2 * (d_in * cand + cand * d_out_p) * w_bytes  # W1/W2 tiles x2
                    + 2 * 4 * cand + 2 * 4 * d_out_p              # b1/b2 tiles
                    + tile_act_bytes(tb, cand))
            if step <= budget:
                th = cand
                break
        n_h = h_p // th
        grid_spec = pltpu.PrefetchScalarGridSpec(
            num_scalar_prefetch=0,
            grid=(n_b, n_h),
            in_specs=[
                pl.BlockSpec((tb, d_in), lambda i, k: (i, 0)),      # x tile
                pl.BlockSpec((d_in, th), lambda i, k: (0, k)),      # W1 h-tile
                pl.BlockSpec((1, th), lambda i, k: (0, k)),         # b1 h-tile
                pl.BlockSpec((th, d_out_p), lambda i, k: (k, 0)),   # W2 h-tile
                const_spec((1, d_out_p), 2),                        # b2 resident
            ],
            out_specs=pl.BlockSpec((tb, d_out_p), lambda i, k: (i, 0)),
            scratch_shapes=[pltpu.VMEM((tb, d_out_p), jnp.float32)],
        )
        out_p = pl.pallas_call(
            _mlp_kernel_htile,
            out_shape=jax.ShapeDtypeStruct((batch, d_out_p), out_dtype),
            grid_spec=grid_spec,
            compiler_params=pltpu.CompilerParams(
                dimension_semantics=("parallel", "arbitrary"),
                vmem_limit_bytes=int(budget)),
            cost_estimate=cost,
        )(x, params.w1, params.b1, params.w2, params.b2)

    # Slice off the lane padding of the output dim.
    return out_p[:, :params.d_out]


def init_params(key, input_size, hidden_size, output_size):
    """Deterministic PyTorch-style (Kaiming-uniform-ish) init, f32."""
    k1, k2, k3, k4 = jax.random.split(key, 4)
    bound1 = 1.0 / jnp.sqrt(input_size)
    bound2 = 1.0 / jnp.sqrt(hidden_size)
    w1 = jax.random.uniform(k1, (hidden_size, input_size), jnp.float32, -bound1, bound1)
    b1 = jax.random.uniform(k2, (hidden_size,), jnp.float32, -bound1, bound1)
    w2 = jax.random.uniform(k3, (output_size, hidden_size), jnp.float32, -bound2, bound2)
    b2 = jax.random.uniform(k4, (output_size,), jnp.float32, -bound2, bound2)
    return w1, b1, w2, b2


if __name__ == "__main__":
    batch, input_size, hidden_size, output_size = 8, 32, 64, 1

    key = jax.random.PRNGKey(0)
    kx, kp = jax.random.split(key)
    x = jax.random.normal(kx, (batch, input_size), jnp.float32)
    w1, b1, w2, b2 = init_params(kp, input_size, hidden_size, output_size)

    # One-time layout plumbing (transpose / pad / bf16 cast), cached.
    params = prepare_params(w1, b1, w2, b2)

    # Pure-JAX f32 reference of the forward semantics (fc1 -> ReLU -> fc2).
    ref = jnp.maximum(x @ w1.T + b1, 0.0) @ w2.T + b2

    def run_and_check(single_buffer_weights):
        fwd = jax.jit(lambda xx: mlp_forward(
            xx, params, single_buffer_weights=single_buffer_weights))
        out = jax.block_until_ready(fwd(x))
        if out.shape != (batch, output_size):
            raise AssertionError(f"bad shape {out.shape}")
        # bf16 MXU operands vs f32 reference -> relaxed tolerance.
        if not bool(jnp.allclose(out, ref, atol=3e-2, rtol=3e-2)):
            raise AssertionError(
                f"mismatch, max err {float(jnp.max(jnp.abs(out - ref)))}")
        return out

    try:
        out = run_and_check(True)          # single-buffered resident weights
    except Exception:
        # This jax/libtpu build rejects pl.Buffered(1); fall back to default
        # double-buffering of the (constant-index) weight blocks.
        out = run_and_check(False)

    print("KERNEL_OK")
</pallas_src>

<mosaic_0001>
module attributes {stable_mosaic.version = 11 : i64} {
  func.func @_mlp_kernel_fused(%arg0: i32, %arg1: memref<8x32xf32, #tpu.memory_space<vmem>>, %arg2: memref<32x128xbf16, #tpu.memory_space<vmem>>, %arg3: memref<1x128xf32, #tpu.memory_space<vmem>>, %arg4: memref<128x128xbf16, #tpu.memory_space<vmem>>, %arg5: memref<1x128xf32, #tpu.memory_space<vmem>>, %arg6: memref<8x128xf32, #tpu.memory_space<vmem>>) attributes {dimension_semantics = [#tpu.dimension_semantics<parallel>], iteration_bounds = array<i64: 1>, scalar_prefetch = 0 : i64, scratch_operands = 0 : i64, tpu.core_type = #tpu.core_type<tc>, window_params = [{transform_indices = @transform_0, window_bounds = array<i64: 8, 32>}, {pipeline_mode = #tpu.pipeline_mode<synchronous>, transform_indices = @transform_1, window_bounds = array<i64: 32, 128>}, {pipeline_mode = #tpu.pipeline_mode<synchronous>, transform_indices = @transform_2, window_bounds = array<i64: 1, 128>}, {pipeline_mode = #tpu.pipeline_mode<synchronous>, transform_indices = @transform_3, window_bounds = array<i64: 128, 128>}, {pipeline_mode = #tpu.pipeline_mode<synchronous>, transform_indices = @transform_4, window_bounds = array<i64: 1, 128>}, {transform_indices = @transform_5, window_bounds = array<i64: 8, 128>}]} {
    %c0 = arith.constant 0 : index
    %c0_0 = arith.constant 0 : index
    %0 = vector.load %arg1[%c0, %c0_0] : memref<8x32xf32, #tpu.memory_space<vmem>>, vector<8x32xf32>
    %1 = arith.truncf %0 : vector<8x32xf32> to vector<8x32xbf16>
    %c0_1 = arith.constant 0 : index
    %c0_2 = arith.constant 0 : index
    %2 = vector.load %arg2[%c0_1, %c0_2] : memref<32x128xbf16, #tpu.memory_space<vmem>>, vector<32x128xbf16>
    %cst = arith.constant dense<0.000000e+00> : vector<8x128xf32>
    %3 = tpu.matmul %1, %2, %cst {dimension_numbers = #tpu.dot_dimension_numbers<[1], [0], [0], [1], [0, 0, 1, 1], [], []>} : vector<8x32xbf16>, vector<32x128xbf16>, vector<8x128xf32> -> vector<8x128xf32>
    %c0_3 = arith.constant 0 : index
    %c0_4 = arith.constant 0 : index
    %4 = vector.load %arg3[%c0_3, %c0_4] : memref<1x128xf32, #tpu.memory_space<vmem>>, vector<1x128xf32>
    %5 = vector.broadcast %4 : vector<1x128xf32> to vector<8x128xf32>
    %6 = arith.addf %3, %5 : vector<8x128xf32>
    %cst_5 = arith.constant 0.000000e+00 : f32
    %7 = vector.broadcast %cst_5 : f32 to vector<8x128xf32>
    %8 = arith.maximumf %6, %7 : vector<8x128xf32>
    %9 = arith.truncf %8 : vector<8x128xf32> to vector<8x128xbf16>
    %c0_6 = arith.constant 0 : index
    %c0_7 = arith.constant 0 : index
    %10 = vector.load %arg4[%c0_6, %c0_7] : memref<128x128xbf16, #tpu.memory_space<vmem>>, vector<128x128xbf16>
    %cst_8 = arith.constant dense<0.000000e+00> : vector<8x128xf32>
    %11 = tpu.matmul %9, %10, %cst_8 {dimension_numbers = #tpu.dot_dimension_numbers<[1], [0], [0], [1], [0, 0, 1, 1], [], []>} : vector<8x128xbf16>, vector<128x128xbf16>, vector<8x128xf32> -> vector<8x128xf32>
    %c0_9 = arith.constant 0 : index
    %c0_10 = arith.constant 0 : index
    %12 = vector.load %arg5[%c0_9, %c0_10] : memref<1x128xf32, #tpu.memory_space<vmem>>, vector<1x128xf32>
    %13 = vector.broadcast %12 : vector<1x128xf32> to vector<8x128xf32>
    %14 = arith.addf %11, %13 : vector<8x128xf32>
    %c0_11 = arith.constant 0 : index
    %c0_12 = arith.constant 0 : index
    %15 = vector.load %arg6[%c0_11, %c0_12] : memref<8x128xf32, #tpu.memory_space<vmem>>, vector<8x128xf32>
    tpu.vector_store %arg6[%c0_11, %c0_12], %14 {strides = array<i32>} : memref<8x128xf32, #tpu.memory_space<vmem>>, vector<8x128xf32>,
    return
  }
  func.func @transform_0(%arg0: i32) -> (i32, i32) {
    %c0_i32 = arith.constant 0 : i32
    %c0_i32_0 = arith.constant 0 : i32
    return %arg0, %c0_i32 : i32, i32
  }
  func.func @transform_1(%arg0: i32) -> (i32, i32) {
    %c0_i32 = arith.constant 0 : i32
    %c0_i32_0 = arith.constant 0 : i32
    %c0_i32_1 = arith.constant 0 : i32
    return %c0_i32, %c0_i32_0 : i32, i32
  }
  func.func @transform_2(%arg0: i32) -> (i32, i32) {
    %c0_i32 = arith.constant 0 : i32
    %c0_i32_0 = arith.constant 0 : i32
    %c0_i32_1 = arith.constant 0 : i32
    return %c0_i32, %c0_i32_0 : i32, i32
  }
  func.func @transform_3(%arg0: i32) -> (i32, i32) {
    %c0_i32 = arith.constant 0 : i32
    %c0_i32_0 = arith.constant 0 : i32
    %c0_i32_1 = arith.constant 0 : i32
    return %c0_i32, %c0_i32_0 : i32, i32
  }
  func.func @transform_4(%arg0: i32) -> (i32, i32) {
    %c0_i32 = arith.constant 0 : i32
    %c0_i32_0 = arith.constant 0 : i32
    %c0_i32_1 = arith.constant 0 : i32
    return %c0_i32, %c0_i32_0 : i32, i32
  }
  func.func @transform_5(%arg0: i32) -> (i32, i32) {
    %c0_i32 = arith.constant 0 : i32
    %c0_i32_0 = arith.constant 0 : i32
    return %arg0, %c0_i32 : i32, i32
  }
}

module attributes {stable_mosaic.version = 11 : i64} {
  func.func @_mlp_kernel_fused(%arg0: i32, %arg1: memref<8x32xf32, #tpu.memory_space<vmem>>, %arg2: memref<32x128xbf16, #tpu.memory_space<vmem>>, %arg3: memref<1x128xf32, #tpu.memory_space<vmem>>, %arg4: memref<128x128xbf16, #tpu.memory_space<vmem>>, %arg5: memref<1x128xf32, #tpu.memory_space<vmem>>, %arg6: memref<8x128xf32, #tpu.memory_space<vmem>>) attributes {dimension_semantics = [#tpu.dimension_semantics<parallel>], iteration_bounds = array<i64: 1>, scalar_prefetch = 0 : i64, scratch_operands = 0 : i64, tpu.core_type = #tpu.core_type<tc>, window_params = [{transform_indices = @transform_0, window_bounds = array<i64: 8, 32>}, {pipeline_mode = #tpu.pipeline_mode<synchronous>, transform_indices = @transform_1, window_bounds = array<i64: 32, 128>}, {pipeline_mode = #tpu.pipeline_mode<synchronous>, transform_indices = @transform_2, window_bounds = array<i64: 1, 128>}, {pipeline_mode = #tpu.pipeline_mode<synchronous>, transform_indices = @transform_3, window_bounds = array<i64: 128, 128>}, {pipeline_mode = #tpu.pipeline_mode<synchronous>, transform_indices = @transform_4, window_bounds = array<i64: 1, 128>}, {transform_indices = @transform_5, window_bounds = array<i64: 8, 128>}]} {
    %c0 = arith.constant 0 : index
    %c0_0 = arith.constant 0 : index
    %0 = vector.load %arg1[%c0, %c0_0] : memref<8x32xf32, #tpu.memory_space<vmem>>, vector<8x32xf32>
    %1 = arith.truncf %0 : vector<8x32xf32> to vector<8x32xbf16>
    %c0_1 = arith.constant 0 : index
    %c0_2 = arith.constant 0 : index
    %2 = vector.load %arg2[%c0_1, %c0_2] : memref<32x128xbf16, #tpu.memory_space<vmem>>, vector<32x128xbf16>
    %cst = arith.constant dense<0.000000e+00> : vector<8x128xf32>
    %3 = tpu.matmul %1, %2, %cst {dimension_numbers = #tpu.dot_dimension_numbers<[1], [0], [0], [1], [0, 0, 1, 1], [], []>} : vector<8x32xbf16>, vector<32x128xbf16>, vector<8x128xf32> -> vector<8x128xf32>
    %c0_3 = arith.constant 0 : index
    %c0_4 = arith.constant 0 : index
    %4 = vector.load %arg3[%c0_3, %c0_4] : memref<1x128xf32, #tpu.memory_space<vmem>>, vector<1x128xf32>
    %5 = vector.broadcast %4 : vector<1x128xf32> to vector<8x128xf32>
    %6 = arith.addf %3, %5 : vector<8x128xf32>
    %cst_5 = arith.constant 0.000000e+00 : f32
    %7 = vector.broadcast %cst_5 : f32 to vector<8x128xf32>
    %8 = arith.maximumf %6, %7 : vector<8x128xf32>
    %9 = arith.truncf %8 : vector<8x128xf32> to vector<8x128xbf16>
    %c0_6 = arith.constant 0 : index
    %c0_7 = arith.constant 0 : index
    %10 = vector.load %arg4[%c0_6, %c0_7] : memref<128x128xbf16, #tpu.memory_space<vmem>>, vector<128x128xbf16>
    %cst_8 = arith.constant dense<0.000000e+00> : vector<8x128xf32>
    %11 = tpu.matmul %9, %10, %cst_8 {dimension_numbers = #tpu.dot_dimension_numbers<[1], [0], [0], [1], [0, 0, 1, 1], [], []>} : vector<8x128xbf16>, vector<128x128xbf16>, vector<8x128xf32> -> vector<8x128xf32>
    %c0_9 = arith.constant 0 : index
    %c0_10 = arith.constant 0 : index
    %12 = vector.load %arg5[%c0_9, %c0_10] : memref<1x128xf32, #tpu.memory_space<vmem>>, vector<1x128xf32>
    %13 = vector.broadcast %12 : vector<1x128xf32> to vector<8x128xf32>
    %14 = arith.addf %11, %13 : vector<8x128xf32>
    %c0_11 = arith.constant 0 : index
    %c0_12 = arith.constant 0 : index
    %15 = vector.load %arg6[%c0_11, %c0_12] : memref<8x128xf32, #tpu.memory_space<vmem>>, vector<8x128xf32>
    tpu.vector_store %arg6[%c0_11, %c0_12], %14 {strides = array<i32>} : memref<8x128xf32, #tpu.memory_space<vmem>>, vector<8x128xf32>,
    return
  }
  func.func @transform_0(%arg0: i32) -> (i32, i32) {
    %c0_i32 = arith.constant 0 : i32
    %c0_i32_0 = arith.constant 0 : i32
    return %arg0, %c0_i32 : i32, i32
  }
  func.func @transform_1(%arg0: i32) -> (i32, i32) {
    %c0_i32 = arith.constant 0 : i32
    %c0_i32_0 = arith.constant 0 : i32
    %c0_i32_1 = arith.constant 0 : i32
    return %c0_i32, %c0_i32_0 : i32, i32
  }
  func.func @transform_2(%arg0: i32) -> (i32, i32) {
    %c0_i32 = arith.constant 0 : i32
    %c0_i32_0 = arith.constant 0 : i32
    %c0_i32_1 = arith.constant 0 : i32
    return %c0_i32, %c0_i32_0 : i32, i32
  }
  func.func @transform_3(%arg0: i32) -> (i32, i32) {
    %c0_i32 = arith.constant 0 : i32
    %c0_i32_0 = arith.constant 0 : i32
    %c0_i32_1 = arith.constant 0 : i32
    return %c0_i32, %c0_i32_0 : i32, i32
  }
  func.func @transform_4(%arg0: i32) -> (i32, i32) {
    %c0_i32 = arith.constant 0 : i32
    %c0_i32_0 = arith.constant 0 : i32
    %c0_i32_1 = arith.constant 0 : i32
    return %c0_i32, %c0_i32_0 : i32, i32
  }
  func.func @transform_5(%arg0: i32) -> (i32, i32) {
    %c0_i32 = arith.constant 0 : i32
    %c0_i32_0 = arith.constant 0 : i32
    return %arg0, %c0_i32 : i32, i32
  }
}

</mosaic_0001>

<llo_original>
// kernel: _lambda_.1
$region0: #{_lambda_.1}
  #allocation0 [shape = 'u32[]', space=smem, size = 0x4, offset = 0x4, fixed_abs, tag = 'smem constant byte address 0x4 - core index']
  #allocation1 [shape = 'u32[144,128]{1,0:T(1,128)}', space=vmem, size = 0x12000, scoped, tag = 'internal scratch']
  %s0 = inlined_call_operand.hbm [shape: f32[8,32], index: 0, kind: input, shape index: {}]
  %s1 = inlined_call_operand.vmem [shape: bf16[32,128], index: 1, kind: input, shape index: {}]
  %s2 = inlined_call_operand.vmem [shape: f32[1,128], index: 2, kind: input, shape index: {}]
  %s3 = inlined_call_operand.hbm [shape: bf16[128,128], index: 3, kind: input, shape index: {}]
  %s4 = inlined_call_operand.vmem [shape: f32[1,128], index: 4, kind: input, shape index: {}]
  %s5 = inlined_call_operand.vmem [shape: f32[8,128], index: 5, kind: output, shape index: {}]
  %s6 = sld [smem:[#allocation0]]
  $region38: #{_lambda_.1} parent=0
    _
  %s8 = ssub.s32 1, %s6
  %s9 = scalar_select 0, %s8, %s6
  $region1: #{_lambda_.1} parent=0
    #allocation2 [shape = 'u8[4096]{0}', space=vmem, size = 0x1000, scoped, tag = 'input window, operand 0, single buffered']
    #allocation3 [shape = 's32[1]{0}', space=sflag, size = 0x4, scoped, tag = 'scoped memory for _lambda_.1']
    #allocation4 [shape = 'u8[32768]{0}', space=vmem, size = 0x8000, scoped, tag = 'input window, operand 3, single buffered']
    #allocation5 [shape = 's32[1]{0}', space=sflag, size = 0x4, scoped, tag = 'scoped memory for _lambda_.1']
    %10 = vsyncpa [#allocation3], 0
    %11 = vsyncpa [#allocation5], 0
    // Predicated region
    $region2: #{_lambda_.1} parent=1 // pred_check
      _
    $region3: #{_lambda_.1} parent=1 // pred_check_branch
      %13 = sbr.rel (0) target = $region5
    $region4: #{_lambda_.1} parent=1 // pred_region
      %s15 = ssub.s32 128, 128
      %16 = vsyncadd [#allocation3], %s15
      %s18 = sshll.u32 [#allocation2], 4
      %s19 = int_to_ptr.vmem [resolvable:$true] %s18
      %21 = dma.hbm_to_vmem [thread:$0]  %s0, 128, %s19, [#allocation3]
    $region5: #{_lambda_.1} parent=1 // pred_fallthru
      _
    // Predicated region
    $region6: #{_lambda_.1} parent=1 // pred_check
      _
    $region7: #{_lambda_.1} parent=1 // pred_check_branch
      %23 = sbr.rel (0) target = $region9
    $region8: #{_lambda_.1} parent=1 // pred_region
      _
    $region9: #{_lambda_.1} parent=1 // pred_fallthru
      _
    // Predicated region
    $region10: #{_lambda_.1} parent=1 // pred_check
      _
    $region11: #{_lambda_.1} parent=1 // pred_check_branch
      %25 = sbr.rel (0) target = $region13
    $region12: #{_lambda_.1} parent=1 // pred_region
      _
    $region13: #{_lambda_.1} parent=1 // pred_fallthru
      _
    // Predicated region
    $region14: #{_lambda_.1} parent=1 // pred_check
      _
    $region15: #{_lambda_.1} parent=1 // pred_check_branch
      %27 = sbr.rel (0) target = $region17
    $region16: #{_lambda_.1} parent=1 // pred_region
      %s29 = ssub.s32 1024, 1024
      %30 = vsyncadd [#allocation5], %s29
      %s31 = sshll.u32 [#allocation4], 4
      %s32 = int_to_ptr.vmem [resolvable:$true] %s31
      %37 = dma.hbm_to_vmem [thread:$0]  %s3, 1024, %s32, [#allocation5], 64, 64, 4
    $region17: #{_lambda_.1} parent=1 // pred_fallthru
      _
    // Predicated region
    $region18: #{_lambda_.1} parent=1 // pred_check
      _
    $region19: #{_lambda_.1} parent=1 // pred_check_branch
      %39 = sbr.rel (0) target = $region21
    $region20: #{_lambda_.1} parent=1 // pred_region
      _
    $region21: #{_lambda_.1} parent=1 // pred_fallthru
      _
    // Predicated region
    $region22: #{_lambda_.1} parent=1 // pred_check
      _
    $region23: #{_lambda_.1} parent=1 // pred_check_branch
      %41 = sbr.rel (0) target = $region25
    $region24: #{_lambda_.1} parent=1 // pred_region
      %42 = dma.done [#allocation3], 128
    $region25: #{_lambda_.1} parent=1 // pred_fallthru
      _
    // Predicated region
    $region26: #{_lambda_.1} parent=1 // pred_check
      _
    $region27: #{_lambda_.1} parent=1 // pred_check_branch
      %44 = sbr.rel (0) target = $region29
    $region28: #{_lambda_.1} parent=1 // pred_region
      %45 = dma.done [#allocation5], 1024
    $region29: #{_lambda_.1} parent=1 // pred_fallthru
      _
    %v47 = vld [vmem:[#allocation2] sm:$0xff]
    %v48 = vpack.c.bf16 %v47, %v47
    %v49 = vld [vmem:[%s1] sm:$0xf]
    %v50 = vld [vmem:[%s1 + $0x4] sm:$0xf]
    %v51 = vld [vmem:[%s1 + $0x8] sm:$0xf]
    %v52 = vld [vmem:[%s1 + $0xc] sm:$0xf]
    %v53 = vld [vmem:[%s2] sm:$0x1]
    %v55 = vlaneseq
    %v56 = vshrl.u32 %v55, 7
    %v57 = vsub.s32 0, %v56
    %v58 = vrot.slane %v53, %v57
    %v64 = vunpack.c.l.b16 %v49
    %v65 = vunpack.c.l.b16 %v50
    %v66 = vunpack.c.l.b16 %v51
    %v67 = vunpack.c.l.b16 %v52
    %v68 = vpack.c.b16 %v65, %v64
    %v69 = vpack.c.b16 %v67, %v66
    %vm72 = vcmask 261120
    %v74 = vsel %vm72, %v48, 0
    %76 = vmatprep.subr.bf16.mxu0 0
    %77 = vmatpush1.bf16.msra.mxu0 %v68
    %78 = vmatprep.subr.bf16.mxu0 0
    %79 = vmatpush1.bf16.msra.mxu0 %v69
    %80 = vmatprep.subr.bf16.mxu0 0
    %81 = vmatpush1.bf16.msra.mxu0 0
    %82 = vmatprep.subr.bf16.mxu0 0
    %83 = vmatpush1.bf16.msra.mxu0 0
    %84 = vmatprep.subr.bf16.mxu0 0
    %85 = vmatpush1.bf16.msra.mxu0 0
    %86 = vmatprep.subr.bf16.mxu0 0
    %87 = vmatpush1.bf16.msra.mxu0 0
    %88 = vmatprep.subr.bf16.mxu0 0
    %89 = vmatpush1.bf16.msra.mxu0 0
    %90 = vmatprep.subr.bf16.mxu0 0
    %91 = vmatpush1.bf16.msra.mxu0 0
    %92 = vmatprep.subr.bf16.mxu0 0
    %93 = vmatpush1.bf16.msra.mxu0 0
    %94 = vmatprep.subr.bf16.mxu0 0
    %95 = vmatpush1.bf16.msra.mxu0 0
    %96 = vmatprep.subr.bf16.mxu0 0
    %97 = vmatpush1.bf16.msra.mxu0 0
    %98 = vmatprep.subr.bf16.mxu0 0
    %99 = vmatpush1.bf16.msra.mxu0 0
    %100 = vmatprep.subr.bf16.mxu0 0
    %101 = vmatpush1.bf16.msra.mxu0 0
    %102 = vmatprep.subr.bf16.mxu0 0
    %103 = vmatpush1.bf16.msra.mxu0 0
    %104 = vmatprep.subr.bf16.mxu0 0
    %105 = vmatpush1.bf16.msra.mxu0 0
    %106 = vmatprep.subr.bf16.mxu0 0
    %107 = vmatpush1.bf16.msra.mxu0 0
    %108 = vmatprep.mubr.bf16.mxu0 0
    %109 = vmatmul.mubr.bf16.gmra.mrb[0].mxu0 %v74
    %v110 = vpop.f32.mrb[0].mxu0
    %v111 = vadd.f32 %v58, %v110
    %v112 = vpop.f32.mrb[0].mxu0
    %v113 = vpop.f32.mrb[0].mxu0
    %v114 = vpop.f32.mrb[0].mxu0
    %115 = vdwg.mxu0
    %v116 = vmax.f32 %v111, 0.0
    %v117 = vpack.c.bf16 %v116, %v116
    %v118 = vld [vmem:[#allocation4] sm:$0xf]
    %v119 = vld [vmem:[#allocation4 + $0x4] sm:$0xf]
    %v120 = vld [vmem:[#allocation4 + $0x8] sm:$0xf]
    %v121 = vld [vmem:[#allocation4 + $0xc] sm:$0xf]
    %v122 = vld [vmem:[#allocation4 + $0x10] sm:$0xf]
    %v123 = vld [vmem:[#allocation4 + $0x14] sm:$0xf]
    %v124 = vld [vmem:[#allocation4 + $0x18] sm:$0xf]
    %v125 = vld [vmem:[#allocation4 + $0x1c] sm:$0xf]
    %v126 = vld [vmem:[#allocation4 + $0x20] sm:$0xf]
    %v127 = vld [vmem:[#allocation4 + $0x24] sm:$0xf]
    %v128 = vld [vmem:[#allocation4 + $0x28] sm:$0xf]
    %v129 = vld [vmem:[#allocation4 + $0x2c] sm:$0xf]
    %v130 = vld [vmem:[#allocation4 + $0x30] sm:$0xf]
    %v131 = vld [vmem:[#allocation4 + $0x34] sm:$0xf]
    %v132 = vld [vmem:[#allocation4 + $0x38] sm:$0xf]
    %v133 = vld [vmem:[#allocation4 + $0x3c] sm:$0xf]
    %v134 = vld [vmem:[%s4] sm:$0x1]
    %v136 = vlaneseq
    %v137 = vshrl.u32 %v136, 7
    %v138 = vsub.s32 0, %v137
    %v139 = vrot.slane %v134, %v138
    %v157 = vunpack.c.l.b16 %v118
    %v158 = vunpack.c.l.b16 %v119
    %v159 = vunpack.c.l.b16 %v120
    %v160 = vunpack.c.l.b16 %v121
    %v161 = vunpack.c.l.b16 %v122
    %v162 = vunpack.c.l.b16 %v123
    %v163 = vunpack.c.l.b16 %v124
    %v164 = vunpack.c.l.b16 %v125
    %v165 = vunpack.c.l.b16 %v126
    %v166 = vunpack.c.l.b16 %v127
    %v167 = vunpack.c.l.b16 %v128
    %v168 = vunpack.c.l.b16 %v129
    %v169 = vunpack.c.l.b16 %v130
    %v170 = vunpack.c.l.b16 %v131
    %v171 = vunpack.c.l.b16 %v132
    %v172 = vunpack.c.l.b16 %v133
    %v173 = vpack.c.b16 %v158, %v157
    %v174 = vpack.c.b16 %v160, %v159
    %v175 = vpack.c.b16 %v162, %v161
    %v176 = vpack.c.b16 %v164, %v163
    %v177 = vpack.c.b16 %v166, %v165
    %v178 = vpack.c.b16 %v168, %v167
    %v179 = vpack.c.b16 %v170, %v169
    %v180 = vpack.c.b16 %v172, %v171
    %189 = vmatprep.subr.bf16.mxu0 0
    %190 = vmatpush1.bf16.msra.mxu0 %v173
    %191 = vmatprep.subr.bf16.mxu0 0
    %192 = vmatpush1.bf16.msra.mxu0 %v174
    %193 = vmatprep.subr.bf16.mxu0 0
    %194 = vmatpush1.bf16.msra.mxu0 %v175
    %195 = vmatprep.subr.bf16.mxu0 0
    %196 = vmatpush1.bf16.msra.mxu0 %v176
    %197 = vmatprep.subr.bf16.mxu0 0
    %198 = vmatpush1.bf16.msra.mxu0 %v177
    %199 = vmatprep.subr.bf16.mxu0 0
    %200 = vmatpush1.bf16.msra.mxu0 %v178
    %201 = vmatprep.subr.bf16.mxu0 0
    %202 = vmatpush1.bf16.msra.mxu0 %v179
    %203 = vmatprep.subr.bf16.mxu0 0
    %204 = vmatpush1.bf16.msra.mxu0 %v180
    %205 = vmatprep.subr.bf16.mxu0 0
    %206 = vmatpush1.bf16.msra.mxu0 0
    %207 = vmatprep.subr.bf16.mxu0 0
    %208 = vmatpush1.bf16.msra.mxu0 0
    %209 = vmatprep.subr.bf16.mxu0 0
    %210 = vmatpush1.bf16.msra.mxu0 0
    %211 = vmatprep.subr.bf16.mxu0 0
    %212 = vmatpush1.bf16.msra.mxu0 0
    %213 = vmatprep.subr.bf16.mxu0 0
    %214 = vmatpush1.bf16.msra.mxu0 0
    %215 = vmatprep.subr.bf16.mxu0 0
    %216 = vmatpush1.bf16.msra.mxu0 0
    %217 = vmatprep.subr.bf16.mxu0 0
    %218 = vmatpush1.bf16.msra.mxu0 0
    %219 = vmatprep.subr.bf16.mxu0 0
    %220 = vmatpush1.bf16.msra.mxu0 0
    %221 = vmatprep.mubr.bf16.mxu0 0
    %222 = vmatmul.mubr.bf16.gmra.mrb[0].mxu0 %v117
    %v223 = vpop.f32.mrb[0].mxu0
    %v224 = vadd.f32 %v139, %v223
    %v225 = vpop.f32.mrb[0].mxu0
    %v226 = vpop.f32.mrb[0].mxu0
    %v227 = vpop.f32.mrb[0].mxu0
    %228 = vdwg.mxu0
    %229 = vst [vmem:[%s5] sm:$0xff] %v224
    // Predicated region
    $region30: #{_lambda_.1} parent=1 // pred_check
      _
    $region31: #{_lambda_.1} parent=1 // pred_check_branch
      %231 = sbr.rel (0) target = $region33
    $region32: #{_lambda_.1} parent=1 // pred_region
      _
    $region33: #{_lambda_.1} parent=1 // pred_fallthru
      _
    // Predicated region
    $region34: #{_lambda_.1} parent=1 // pred_check
      _
    $region35: #{_lambda_.1} parent=1 // pred_check_branch
      %233 = sbr.rel (0) target = $region37
    $region36: #{_lambda_.1} parent=1 // pred_region
      _
    $region37: #{_lambda_.1} parent=1 // pred_fallthru
      _
    %234 = vsyncpa [#allocation3], 1
    %235 = vsyncpa [#allocation5], 1

// kernel: _lambda_.1
$region0: #{_lambda_.1}
  #allocation0 [shape = 'u32[]', space=smem, size = 0x4, offset = 0x4, fixed_abs, tag = 'smem constant byte address 0x4 - core index']
  #allocation1 [shape = 'u32[144,128]{1,0:T(1,128)}', space=vmem, size = 0x12000, scoped, tag = 'internal scratch']
  %s0 = inlined_call_operand.hbm [shape: f32[8,32], index: 0, kind: input, shape index: {}]
  %s1 = inlined_call_operand.vmem [shape: bf16[32,128], index: 1, kind: input, shape index: {}]
  %s2 = inlined_call_operand.vmem [shape: f32[1,128], index: 2, kind: input, shape index: {}]
  %s3 = inlined_call_operand.hbm [shape: bf16[128,128], index: 3, kind: input, shape index: {}]
  %s4 = inlined_call_operand.vmem [shape: f32[1,128], index: 4, kind: input, shape index: {}]
  %s5 = inlined_call_operand.vmem [shape: f32[8,128], index: 5, kind: output, shape index: {}]
  %s6 = sld [smem:[#allocation0]]
  $region38: #{_lambda_.1} parent=0
    _
  %s8 = ssub.s32 1, %s6
  %s9 = scalar_select 0, %s8, %s6
  $region1: #{_lambda_.1} parent=0
    #allocation2 [shape = 'u8[4096]{0}', space=vmem, size = 0x1000, scoped, tag = 'input window, operand 0, single buffered']
    #allocation3 [shape = 's32[1]{0}', space=sflag, size = 0x4, scoped, tag = 'scoped memory for _lambda_.1']
    #allocation4 [shape = 'u8[32768]{0}', space=vmem, size = 0x8000, scoped, tag = 'input window, operand 3, single buffered']
    #allocation5 [shape = 's32[1]{0}', space=sflag, size = 0x4, scoped, tag = 'scoped memory for _lambda_.1']
    %10 = vsyncpa [#allocation3], 0
    %11 = vsyncpa [#allocation5], 0
    // Predicated region
    $region2: #{_lambda_.1} parent=1 // pred_check
      _
    $region3: #{_lambda_.1} parent=1 // pred_check_branch
      %13 = sbr.rel (0) target = $region5
    $region4: #{_lambda_.1} parent=1 // pred_region
      %s15 = ssub.s32 128, 128
      %16 = vsyncadd [#allocation3], %s15
      %s18 = sshll.u32 [#allocation2], 4
      %s19 = int_to_ptr.vmem [resolvable:$true] %s18
      %21 = dma.hbm_to_vmem [thread:$0]  %s0, 128, %s19, [#allocation3]
    $region5: #{_lambda_.1} parent=1 // pred_fallthru
      _
    // Predicated region
    $region6: #{_lambda_.1} parent=1 // pred_check
      _
    $region7: #{_lambda_.1} parent=1 // pred_check_branch
      %23 = sbr.rel (0) target = $region9
    $region8: #{_lambda_.1} parent=1 // pred_region
      _
    $region9: #{_lambda_.1} parent=1 // pred_fallthru
      _
    // Predicated region
    $region10: #{_lambda_.1} parent=1 // pred_check
      _
    $region11: #{_lambda_.1} parent=1 // pred_check_branch
      %25 = sbr.rel (0) target = $region13
    $region12: #{_lambda_.1} parent=1 // pred_region
      _
    $region13: #{_lambda_.1} parent=1 // pred_fallthru
      _
    // Predicated region
    $region14: #{_lambda_.1} parent=1 // pred_check
      _
    $region15: #{_lambda_.1} parent=1 // pred_check_branch
      %27 = sbr.rel (0) target = $region17
    $region16: #{_lambda_.1} parent=1 // pred_region
      %s29 = ssub.s32 1024, 1024
      %30 = vsyncadd [#allocation5], %s29
      %s31 = sshll.u32 [#allocation4], 4
      %s32 = int_to_ptr.vmem [resolvable:$true] %s31
      %37 = dma.hbm_to_vmem [thread:$0]  %s3, 1024, %s32, [#allocation5], 64, 64, 4
    $region17: #{_lambda_.1} parent=1 // pred_fallthru
      _
    // Predicated region
    $region18: #{_lambda_.1} parent=1 // pred_check
      _
    $region19: #{_lambda_.1} parent=1 // pred_check_branch
      %39 = sbr.rel (0) target = $region21
    $region20: #{_lambda_.1} parent=1 // pred_region
      _
    $region21: #{_lambda_.1} parent=1 // pred_fallthru
      _
    // Predicated region
    $region22: #{_lambda_.1} parent=1 // pred_check
      _
    $region23: #{_lambda_.1} parent=1 // pred_check_branch
      %41 = sbr.rel (0) target = $region25
    $region24: #{_lambda_.1} parent=1 // pred_region
      %42 = dma.done [#allocation3], 128
    $region25: #{_lambda_.1} parent=1 // pred_fallthru
      _
    // Predicated region
    $region26: #{_lambda_.1} parent=1 // pred_check
      _
    $region27: #{_lambda_.1} parent=1 // pred_check_branch
      %44 = sbr.rel (0) target = $region29
    $region28: #{_lambda_.1} parent=1 // pred_region
      %45 = dma.done [#allocation5], 1024
    $region29: #{_lambda_.1} parent=1 // pred_fallthru
      _
    %v47 = vld [vmem:[#allocation2] sm:$0xff]
    %v48 = vpack.c.bf16 %v47, %v47
    %v49 = vld [vmem:[%s1] sm:$0xf]
    %v50 = vld [vmem:[%s1 + $0x4] sm:$0xf]
    %v51 = vld [vmem:[%s1 + $0x8] sm:$0xf]
    %v52 = vld [vmem:[%s1 + $0xc] sm:$0xf]
    %v53 = vld [vmem:[%s2] sm:$0x1]
    %v55 = vlaneseq
    %v56 = vshrl.u32 %v55, 7
    %v57 = vsub.s32 0, %v56
    %v58 = vrot.slane %v53, %v57
    %v64 = vunpack.c.l.b16 %v49
    %v65 = vunpack.c.l.b16 %v50
    %v66 = vunpack.c.l.b16 %v51
    %v67 = vunpack.c.l.b16 %v52
    %v68 = vpack.c.b16 %v65, %v64
    %v69 = vpack.c.b16 %v67, %v66
    %vm72 = vcmask 261120
    %v74 = vsel %vm72, %v48, 0
    %76 = vmatprep.subr.bf16.mxu0 0
    %77 = vmatpush1.bf16.msra.mxu0 %v68
    %78 = vmatprep.subr.bf16.mxu0 0
    %79 = vmatpush1.bf16.msra.mxu0 %v69
    %80 = vmatprep.subr.bf16.mxu0 0
    %81 = vmatpush1.bf16.msra.mxu0 0
    %82 = vmatprep.subr.bf16.mxu0 0
    %83 = vmatpush1.bf16.msra.mxu0 0
    %84 = vmatprep.subr.bf16.mxu0 0
    %85 = vmatpush1.bf16.msra.mxu0 0
    %86 = vmatprep.subr.bf16.mxu0 0
    %87 = vmatpush1.bf16.msra.mxu0 0
    %88 = vmatprep.subr.bf16.mxu0 0
    %89 = vmatpush1.bf16.msra.mxu0 0
    %90 = vmatprep.subr.bf16.mxu0 0
    %91 = vmatpush1.bf16.msra.mxu0 0
    %92 = vmatprep.subr.bf16.mxu0 0
    %93 = vmatpush1.bf16.msra.mxu0 0
    %94 = vmatprep.subr.bf16.mxu0 0
    %95 = vmatpush1.bf16.msra.mxu0 0
    %96 = vmatprep.subr.bf16.mxu0 0
    %97 = vmatpush1.bf16.msra.mxu0 0
    %98 = vmatprep.subr.bf16.mxu0 0
    %99 = vmatpush1.bf16.msra.mxu0 0
    %100 = vmatprep.subr.bf16.mxu0 0
    %101 = vmatpush1.bf16.msra.mxu0 0
    %102 = vmatprep.subr.bf16.mxu0 0
    %103 = vmatpush1.bf16.msra.mxu0 0
    %104 = vmatprep.subr.bf16.mxu0 0
    %105 = vmatpush1.bf16.msra.mxu0 0
    %106 = vmatprep.subr.bf16.mxu0 0
    %107 = vmatpush1.bf16.msra.mxu0 0
    %108 = vmatprep.mubr.bf16.mxu0 0
    %109 = vmatmul.mubr.bf16.gmra.mrb[0].mxu0 %v74
    %v110 = vpop.f32.mrb[0].mxu0
    %v111 = vadd.f32 %v58, %v110
    %v112 = vpop.f32.mrb[0].mxu0
    %v113 = vpop.f32.mrb[0].mxu0
    %v114 = vpop.f32.mrb[0].mxu0
    %115 = vdwg.mxu0
    %v116 = vmax.f32 %v111, 0.0
    %v117 = vpack.c.bf16 %v116, %v116
    %v118 = vld [vmem:[#allocation4] sm:$0xf]
    %v119 = vld [vmem:[#allocation4 + $0x4] sm:$0xf]
    %v120 = vld [vmem:[#allocation4 + $0x8] sm:$0xf]
    %v121 = vld [vmem:[#allocation4 + $0xc] sm:$0xf]
    %v122 = vld [vmem:[#allocation4 + $0x10] sm:$0xf]
    %v123 = vld [vmem:[#allocation4 + $0x14] sm:$0xf]
    %v124 = vld [vmem:[#allocation4 + $0x18] sm:$0xf]
    %v125 = vld [vmem:[#allocation4 + $0x1c] sm:$0xf]
    %v126 = vld [vmem:[#allocation4 + $0x20] sm:$0xf]
    %v127 = vld [vmem:[#allocation4 + $0x24] sm:$0xf]
    %v128 = vld [vmem:[#allocation4 + $0x28] sm:$0xf]
    %v129 = vld [vmem:[#allocation4 + $0x2c] sm:$0xf]
    %v130 = vld [vmem:[#allocation4 + $0x30] sm:$0xf]
    %v131 = vld [vmem:[#allocation4 + $0x34] sm:$0xf]
    %v132 = vld [vmem:[#allocation4 + $0x38] sm:$0xf]
    %v133 = vld [vmem:[#allocation4 + $0x3c] sm:$0xf]
    %v134 = vld [vmem:[%s4] sm:$0x1]
    %v136 = vlaneseq
    %v137 = vshrl.u32 %v136, 7
    %v138 = vsub.s32 0, %v137
    %v139 = vrot.slane %v134, %v138
    %v157 = vunpack.c.l.b16 %v118
    %v158 = vunpack.c.l.b16 %v119
    %v159 = vunpack.c.l.b16 %v120
    %v160 = vunpack.c.l.b16 %v121
    %v161 = vunpack.c.l.b16 %v122
    %v162 = vunpack.c.l.b16 %v123
    %v163 = vunpack.c.l.b16 %v124
    %v164 = vunpack.c.l.b16 %v125
    %v165 = vunpack.c.l.b16 %v126
    %v166 = vunpack.c.l.b16 %v127
    %v167 = vunpack.c.l.b16 %v128
    %v168 = vunpack.c.l.b16 %v129
    %v169 = vunpack.c.l.b16 %v130
    %v170 = vunpack.c.l.b16 %v131
    %v171 = vunpack.c.l.b16 %v132
    %v172 = vunpack.c.l.b16 %v133
    %v173 = vpack.c.b16 %v158, %v157
    %v174 = vpack.c.b16 %v160, %v159
    %v175 = vpack.c.b16 %v162, %v161
    %v176 = vpack.c.b16 %v164, %v163
    %v177 = vpack.c.b16 %v166, %v165
    %v178 = vpack.c.b16 %v168, %v167
    %v179 = vpack.c.b16 %v170, %v169
    %v180 = vpack.c.b16 %v172, %v171
    %189 = vmatprep.subr.bf16.mxu0 0
    %190 = vmatpush1.bf16.msra.mxu0 %v173
    %191 = vmatprep.subr.bf16.mxu0 0
    %192 = vmatpush1.bf16.msra.mxu0 %v174
    %193 = vmatprep.subr.bf16.mxu0 0
    %194 = vmatpush1.bf16.msra.mxu0 %v175
    %195 = vmatprep.subr.bf16.mxu0 0
    %196 = vmatpush1.bf16.msra.mxu0 %v176
    %197 = vmatprep.subr.bf16.mxu0 0
    %198 = vmatpush1.bf16.msra.mxu0 %v177
    %199 = vmatprep.subr.bf16.mxu0 0
    %200 = vmatpush1.bf16.msra.mxu0 %v178
    %201 = vmatprep.subr.bf16.mxu0 0
    %202 = vmatpush1.bf16.msra.mxu0 %v179
    %203 = vmatprep.subr.bf16.mxu0 0
    %204 = vmatpush1.bf16.msra.mxu0 %v180
    %205 = vmatprep.subr.bf16.mxu0 0
    %206 = vmatpush1.bf16.msra.mxu0 0
    %207 = vmatprep.subr.bf16.mxu0 0
    %208 = vmatpush1.bf16.msra.mxu0 0
    %209 = vmatprep.subr.bf16.mxu0 0
    %210 = vmatpush1.bf16.msra.mxu0 0
    %211 = vmatprep.subr.bf16.mxu0 0
    %212 = vmatpush1.bf16.msra.mxu0 0
    %213 = vmatprep.subr.bf16.mxu0 0
    %214 = vmatpush1.bf16.msra.mxu0 0
    %215 = vmatprep.subr.bf16.mxu0 0
    %216 = vmatpush1.bf16.msra.mxu0 0
    %217 = vmatprep.subr.bf16.mxu0 0
    %218 = vmatpush1.bf16.msra.mxu0 0
    %219 = vmatprep.subr.bf16.mxu0 0
    %220 = vmatpush1.bf16.msra.mxu0 0
    %221 = vmatprep.mubr.bf16.mxu0 0
    %222 = vmatmul.mubr.bf16.gmra.mrb[0].mxu0 %v117
    %v223 = vpop.f32.mrb[0].mxu0
    %v224 = vadd.f32 %v139, %v223
    %v225 = vpop.f32.mrb[0].mxu0
    %v226 = vpop.f32.mrb[0].mxu0
    %v227 = vpop.f32.mrb[0].mxu0
    %228 = vdwg.mxu0
    %229 = vst [vmem:[%s5] sm:$0xff] %v224
    // Predicated region
    $region30: #{_lambda_.1} parent=1 // pred_check
      _
    $region31: #{_lambda_.1} parent=1 // pred_check_branch
      %231 = sbr.rel (0) target = $region33
    $region32: #{_lambda_.1} parent=1 // pred_region
      _
    $region33: #{_lambda_.1} parent=1 // pred_fallthru
      _
    // Predicated region
    $region34: #{_lambda_.1} parent=1 // pred_check
      _
    $region35: #{_lambda_.1} parent=1 // pred_check_branch
      %233 = sbr.rel (0) target = $region37
    $region36: #{_lambda_.1} parent=1 // pred_region
      _
    $region37: #{_lambda_.1} parent=1 // pred_fallthru
      _
    %234 = vsyncpa [#allocation3], 1
    %235 = vsyncpa [#allocation5], 1

</llo_original>
